<compile_context>
chip_gen: v5e
topology: v5e:2x2
jax: 0.10.0
libtpu: 0.0.40
codegen_flags: <defaults>
</compile_context>

<pallas_src>
import jax
import jax.numpy as jnp
from jax.experimental import pallas as pl
from jax.experimental.pallas import tpu as pltpu

IN_F = 50
HID_F = 512
OUT_F = 50


def mlp_kernel(x_ref, w1_ref, b1_ref, w2_ref, b2_ref, o_ref):
    # Cast activations to the weight dtype in VMEM (free VPU op) so the MXU gets
    # matching (bf16 or f32) operands; accumulate in f32.
    x = x_ref[...].astype(w1_ref.dtype)
    h = jnp.dot(x, w1_ref[...], preferred_element_type=jnp.float32)
    h = jnp.maximum(h + b1_ref[...], 0.0)                      # bias + ReLU in f32
    out = jnp.dot(h.astype(w2_ref.dtype), w2_ref[...],
                  preferred_element_type=jnp.float32)
    o_ref[...] = (out + b2_ref[...]).astype(o_ref.dtype)


def mlp_forward(x, w1, b1, w2, b2, *, block_b=512):
    """out = relu(x @ w1 + b1) @ w2 + b2.

    x: (B, 50) f32.  w1: (50, 512), w2: (512, 50) in f32 or bf16 (stored (in, out),
    i.e. transposed vs. torch nn.Linear).  b1: (1, 512), b2: (1, 50) in f32.
    block_b: batch tile; for large B keep B >= 2*block_b so v7x's two TensorCores
    both get grid steps.
    """
    B, in_f = x.shape
    hid = w1.shape[1]
    out_f = w2.shape[1]

    # Clamp the tile to B (a block dim equal to the full array dim is always legal);
    # otherwise block_b=512 is a multiple of 8 and the trailing partial block is masked.
    bb = min(block_b, B)
    n_blocks = pl.cdiv(B, bb)

    grid_spec = pl.GridSpec(
        grid=(n_blocks,),
        in_specs=[
            pl.BlockSpec((bb, in_f), lambda i: (i, 0)),      # stream activations
            pl.BlockSpec((in_f, hid), lambda i: (0, 0)),     # weights stay VMEM-resident
            pl.BlockSpec((1, hid), lambda i: (0, 0)),
            pl.BlockSpec((hid, out_f), lambda i: (0, 0)),
            pl.BlockSpec((1, out_f), lambda i: (0, 0)),
        ],
        out_specs=pl.BlockSpec((bb, out_f), lambda i: (i, 0)),
    )

    return pl.pallas_call(
        mlp_kernel,
        out_shape=jax.ShapeDtypeStruct((B, out_f), x.dtype),
        grid_spec=grid_spec,
        compiler_params=pltpu.CompilerParams(
            dimension_semantics=("parallel",),    # megacore sharding on v7x
        ),
    )(x, w1, b1, w2, b2)


def init_params(key):
    """f32 master params mirroring nn.Linear's U(-1/sqrt(fan_in), 1/sqrt(fan_in))."""
    k1, k2, k3, k4 = jax.random.split(key, 4)
    bound1 = 1.0 / jnp.sqrt(jnp.float32(IN_F))
    bound2 = 1.0 / jnp.sqrt(jnp.float32(HID_F))
    # Stored (in, out) — transposed relative to PyTorch's (out, in) weight layout.
    w1 = jax.random.uniform(k1, (IN_F, HID_F), jnp.float32, -bound1, bound1)
    b1 = jax.random.uniform(k2, (1, HID_F), jnp.float32, -bound1, bound1)
    w2 = jax.random.uniform(k3, (HID_F, OUT_F), jnp.float32, -bound2, bound2)
    b2 = jax.random.uniform(k4, (1, OUT_F), jnp.float32, -bound2, bound2)
    return w1, b1, w2, b2


def prepare_params(w1, b1, w2, b2, weight_dtype=jnp.bfloat16):
    """One-time weight cast (do this at init, not per forward call).

    Weights go to `weight_dtype` (bf16 = full-rate MXU on v5e/v6e/v7x and half the
    weight DMA bytes); biases stay f32 since the bias add runs on the f32 accumulator.
    """
    return (w1.astype(weight_dtype), b1.astype(jnp.float32),
            w2.astype(weight_dtype), b2.astype(jnp.float32))


if __name__ == "__main__":
    key = jax.random.PRNGKey(0)
    kx, kp = jax.random.split(key)

    B = 200  # non-multiple of the batch tile -> exercises the masked partial block
    x = jax.random.normal(kx, (B, IN_F), jnp.float32)
    w1, b1, w2, b2 = init_params(kp)

    # Pure-JAX reference of the forward semantics.
    ref = jnp.maximum(x @ w1 + b1, 0.0) @ w2 + b2

    # f32 weight path (parity with the PyTorch module's arithmetic).
    out_f32 = jax.block_until_ready(mlp_forward(x, w1, b1, w2, b2))
    assert out_f32.shape == (B, OUT_F)
    assert jnp.allclose(out_f32, ref, atol=1e-4, rtol=1e-4)

    # Default inference path: bf16 weight operands, f32 accumulation.
    w1b, b1b, w2b, b2b = prepare_params(w1, b1, w2, b2, jnp.bfloat16)
    out_bf16 = jax.block_until_ready(mlp_forward(x, w1b, b1b, w2b, b2b))
    assert out_bf16.shape == (B, OUT_F)
    assert jnp.allclose(out_bf16, ref, atol=1e-1, rtol=1e-1)

    # Multi-step pipelined grid with a masked trailing partial block (200 = 128 + 72).
    out_pipe = jax.block_until_ready(mlp_forward(x, w1, b1, w2, b2, block_b=128))
    assert jnp.allclose(out_pipe, ref, atol=1e-4, rtol=1e-4)

    print("KERNEL_OK")
</pallas_src>

<mosaic_0001>
module attributes {stable_mosaic.version = 11 : i64} {
  func.func @mlp_kernel(%arg0: i32, %arg1: memref<200x50xf32, #tpu.memory_space<vmem>>, %arg2: memref<50x512xf32, #tpu.memory_space<vmem>>, %arg3: memref<1x512xf32, #tpu.memory_space<vmem>>, %arg4: memref<512x50xf32, #tpu.memory_space<vmem>>, %arg5: memref<1x50xf32, #tpu.memory_space<vmem>>, %arg6: memref<200x50xf32, #tpu.memory_space<vmem>>) attributes {dimension_semantics = [#tpu.dimension_semantics<parallel>], iteration_bounds = array<i64: 1>, scalar_prefetch = 0 : i64, scratch_operands = 0 : i64, tpu.core_type = #tpu.core_type<tc>, window_params = [{transform_indices = @transform_0, window_bounds = array<i64: 200, 50>}, {pipeline_mode = #tpu.pipeline_mode<synchronous>, transform_indices = @transform_1, window_bounds = array<i64: 50, 512>}, {pipeline_mode = #tpu.pipeline_mode<synchronous>, transform_indices = @transform_2, window_bounds = array<i64: 1, 512>}, {pipeline_mode = #tpu.pipeline_mode<synchronous>, transform_indices = @transform_3, window_bounds = array<i64: 512, 50>}, {pipeline_mode = #tpu.pipeline_mode<synchronous>, transform_indices = @transform_4, window_bounds = array<i64: 1, 50>}, {transform_indices = @transform_5, window_bounds = array<i64: 200, 50>}]} {
    %c0 = arith.constant 0 : index
    %c0_0 = arith.constant 0 : index
    %0 = vector.load %arg1[%c0, %c0_0] : memref<200x50xf32, #tpu.memory_space<vmem>>, vector<200x50xf32>
    %c0_1 = arith.constant 0 : index
    %c0_2 = arith.constant 0 : index
    %1 = vector.load %arg2[%c0_1, %c0_2] : memref<50x512xf32, #tpu.memory_space<vmem>>, vector<50x512xf32>
    %cst = arith.constant dense<0.000000e+00> : vector<200x512xf32>
    %2 = tpu.matmul %0, %1, %cst {dimension_numbers = #tpu.dot_dimension_numbers<[1], [0], [0], [1], [0, 0, 1, 1], [], []>} : vector<200x50xf32>, vector<50x512xf32>, vector<200x512xf32> -> vector<200x512xf32>
    %c0_3 = arith.constant 0 : index
    %c0_4 = arith.constant 0 : index
    %3 = vector.load %arg3[%c0_3, %c0_4] : memref<1x512xf32, #tpu.memory_space<vmem>>, vector<1x512xf32>
    %4 = vector.broadcast %3 : vector<1x512xf32> to vector<200x512xf32>
    %5 = arith.addf %2, %4 : vector<200x512xf32>
    %cst_5 = arith.constant 0.000000e+00 : f32
    %6 = vector.broadcast %cst_5 : f32 to vector<200x512xf32>
    %7 = arith.maximumf %5, %6 : vector<200x512xf32>
    %c0_6 = arith.constant 0 : index
    %c0_7 = arith.constant 0 : index
    %8 = vector.load %arg4[%c0_6, %c0_7] : memref<512x50xf32, #tpu.memory_space<vmem>>, vector<512x50xf32>
    %cst_8 = arith.constant dense<0.000000e+00> : vector<200x50xf32>
    %9 = tpu.matmul %7, %8, %cst_8 {dimension_numbers = #tpu.dot_dimension_numbers<[1], [0], [0], [1], [0, 0, 1, 1], [], []>} : vector<200x512xf32>, vector<512x50xf32>, vector<200x50xf32> -> vector<200x50xf32>
    %c0_9 = arith.constant 0 : index
    %c0_10 = arith.constant 0 : index
    %10 = vector.load %arg5[%c0_9, %c0_10] : memref<1x50xf32, #tpu.memory_space<vmem>>, vector<1x50xf32>
    %11 = vector.broadcast %10 : vector<1x50xf32> to vector<200x50xf32>
    %12 = arith.addf %9, %11 : vector<200x50xf32>
    %c0_11 = arith.constant 0 : index
    %c0_12 = arith.constant 0 : index
    %13 = vector.load %arg6[%c0_11, %c0_12] : memref<200x50xf32, #tpu.memory_space<vmem>>, vector<200x50xf32>
    tpu.vector_store %arg6[%c0_11, %c0_12], %12 {strides = array<i32>} : memref<200x50xf32, #tpu.memory_space<vmem>>, vector<200x50xf32>,
    return
  }
  func.func @transform_0(%arg0: i32) -> (i32, i32) {
    %c0_i32 = arith.constant 0 : i32
    %c0_i32_0 = arith.constant 0 : i32
    return %arg0, %c0_i32 : i32, i32
  }
  func.func @transform_1(%arg0: i32) -> (i32, i32) {
    %c0_i32 = arith.constant 0 : i32
    %c0_i32_0 = arith.constant 0 : i32
    %c0_i32_1 = arith.constant 0 : i32
    return %c0_i32, %c0_i32_0 : i32, i32
  }
  func.func @transform_2(%arg0: i32) -> (i32, i32) {
    %c0_i32 = arith.constant 0 : i32
    %c0_i32_0 = arith.constant 0 : i32
    %c0_i32_1 = arith.constant 0 : i32
    return %c0_i32, %c0_i32_0 : i32, i32
  }
  func.func @transform_3(%arg0: i32) -> (i32, i32) {
    %c0_i32 = arith.constant 0 : i32
    %c0_i32_0 = arith.constant 0 : i32
    %c0_i32_1 = arith.constant 0 : i32
    return %c0_i32, %c0_i32_0 : i32, i32
  }
  func.func @transform_4(%arg0: i32) -> (i32, i32) {
    %c0_i32 = arith.constant 0 : i32
    %c0_i32_0 = arith.constant 0 : i32
    %c0_i32_1 = arith.constant 0 : i32
    return %c0_i32, %c0_i32_0 : i32, i32
  }
  func.func @transform_5(%arg0: i32) -> (i32, i32) {
    %c0_i32 = arith.constant 0 : i32
    %c0_i32_0 = arith.constant 0 : i32
    return %arg0, %c0_i32 : i32, i32
  }
}

</mosaic_0001>

<llo_original>
// kernel: tpu_custom_call.1
$region0: #{tpu_custom_call.1}
  #allocation0 [shape = 'u32[]', space=smem, size = 0x4, offset = 0x4, fixed_abs, tag = 'smem constant byte address 0x4 - core index']
  #allocation1 [shape = 'u32[72,128]{1,0:T(1,128)}', space=vmem, size = 0x9000, scoped, tag = 'internal scratch']
  %s0 = inlined_call_operand.vmem [shape: f32[200,50], index: 0, kind: input, shape index: {}]
  %s1 = inlined_call_operand.vmem [shape: f32[50,512], index: 1, kind: input, shape index: {}]
  %s2 = inlined_call_operand.vmem [shape: f32[1,512], index: 2, kind: input, shape index: {}]
  %s3 = inlined_call_operand.vmem [shape: f32[512,50], index: 3, kind: input, shape index: {}]
  %s4 = inlined_call_operand.vmem [shape: f32[1,50], index: 4, kind: input, shape index: {}]
  %s5 = inlined_call_operand.vmem [shape: f32[200,50], index: 5, kind: output, shape index: {}]
  %s6 = sld [smem:[#allocation0]]
  $region30: #{tpu_custom_call.1} parent=0
    _
  %s8 = ssub.s32 1, %s6
  %s9 = scalar_select 0, %s8, %s6
  // Predicated region
  $region2: #{tpu_custom_call.1} parent=0 // pred_check
    _
  $region3: #{tpu_custom_call.1} parent=0 // pred_check_branch
    %11 = sbr.rel (0) target = $region5
  $region4: #{tpu_custom_call.1} parent=0 // pred_region
    _
  $region5: #{tpu_custom_call.1} parent=0 // pred_fallthru
    _
  // Predicated region
  $region6: #{tpu_custom_call.1} parent=0 // pred_check
    _
  $region7: #{tpu_custom_call.1} parent=0 // pred_check_branch
    %13 = sbr.rel (0) target = $region9
  $region8: #{tpu_custom_call.1} parent=0 // pred_region
    _
  $region9: #{tpu_custom_call.1} parent=0 // pred_fallthru
    _
  // Predicated region
  $region10: #{tpu_custom_call.1} parent=0 // pred_check
    _
  $region11: #{tpu_custom_call.1} parent=0 // pred_check_branch
    %15 = sbr.rel (0) target = $region13
  $region12: #{tpu_custom_call.1} parent=0 // pred_region
    _
  $region13: #{tpu_custom_call.1} parent=0 // pred_fallthru
    _
  // Predicated region
  $region14: #{tpu_custom_call.1} parent=0 // pred_check
    _
  $region15: #{tpu_custom_call.1} parent=0 // pred_check_branch
    %17 = sbr.rel (0) target = $region17
  $region16: #{tpu_custom_call.1} parent=0 // pred_region
    _
  $region17: #{tpu_custom_call.1} parent=0 // pred_fallthru
    _
  // Predicated region
  $region18: #{tpu_custom_call.1} parent=0 // pred_check
    _
  $region19: #{tpu_custom_call.1} parent=0 // pred_check_branch
    %19 = sbr.rel (0) target = $region21
  $region20: #{tpu_custom_call.1} parent=0 // pred_region
    _
  $region21: #{tpu_custom_call.1} parent=0 // pred_fallthru
    _
  %v20 = vld [vmem:[%s0] sm:$0xff]
  %v21 = vld [vmem:[%s0 + $0x8] sm:$0xff]
  %v22 = vld [vmem:[%s0 + $0x10] sm:$0xff]
  %v23 = vld [vmem:[%s0 + $0x18] sm:$0xff]
  %v24 = vld [vmem:[%s0 + $0x20] sm:$0xff]
  %v25 = vld [vmem:[%s0 + $0x28] sm:$0xff]
  %v26 = vld [vmem:[%s0 + $0x30] sm:$0xff]
  %v27 = vld [vmem:[%s0 + $0x38] sm:$0xff]
  %v28 = vld [vmem:[%s0 + $0x40] sm:$0xff]
  %v29 = vld [vmem:[%s0 + $0x48] sm:$0xff]
  %v30 = vld [vmem:[%s0 + $0x50] sm:$0xff]
  %v31 = vld [vmem:[%s0 + $0x58] sm:$0xff]
  %v32 = vld [vmem:[%s0 + $0x60] sm:$0xff]
  %v33 = vld [vmem:[%s0 + $0x68] sm:$0xff]
  %v34 = vld [vmem:[%s0 + $0x70] sm:$0xff]
  %v35 = vld [vmem:[%s0 + $0x78] sm:$0xff]
  %v36 = vld [vmem:[%s0 + $0x80] sm:$0xff]
  %v37 = vld [vmem:[%s0 + $0x88] sm:$0xff]
  %v38 = vld [vmem:[%s0 + $0x90] sm:$0xff]
  %v39 = vld [vmem:[%s0 + $0x98] sm:$0xff]
  %v40 = vld [vmem:[%s0 + $0xa0] sm:$0xff]
  %v41 = vld [vmem:[%s0 + $0xa8] sm:$0xff]
  %v42 = vld [vmem:[%s0 + $0xb0] sm:$0xff]
  %v43 = vld [vmem:[%s0 + $0xb8] sm:$0xff]
  %v44 = vld [vmem:[%s0 + $0xc0] sm:$0xff]
  %v45 = vld [vmem:[%s1] sm:$0xff]
  %v46 = vld [vmem:[%s1 + $0x8] sm:$0xff]
  %v47 = vld [vmem:[%s1 + $0x10] sm:$0xff]
  %v48 = vld [vmem:[%s1 + $0x18] sm:$0xff]
  %v49 = vld [vmem:[%s1 + $0x20] sm:$0xff]
  %v50 = vld [vmem:[%s1 + $0x28] sm:$0xff]
  %v51 = vld [vmem:[%s1 + $0x30] sm:$0xff]
  %v52 = vld [vmem:[%s1 + $0x38] sm:$0xff]
  %v53 = vld [vmem:[%s1 + $0x40] sm:$0xff]
  %v54 = vld [vmem:[%s1 + $0x48] sm:$0xff]
  %v55 = vld [vmem:[%s1 + $0x50] sm:$0xff]
  %v56 = vld [vmem:[%s1 + $0x58] sm:$0xff]
  %v57 = vld [vmem:[%s1 + $0x60] sm:$0xff]
  %v58 = vld [vmem:[%s1 + $0x68] sm:$0xff]
  %v59 = vld [vmem:[%s1 + $0x70] sm:$0xff]
  %v60 = vld [vmem:[%s1 + $0x78] sm:$0xff]
  %v61 = vld [vmem:[%s1 + $0x80] sm:$0xff]
  %v62 = vld [vmem:[%s1 + $0x88] sm:$0xff]
  %v63 = vld [vmem:[%s1 + $0x90] sm:$0xff]
  %v64 = vld [vmem:[%s1 + $0x98] sm:$0xff]
  %v65 = vld [vmem:[%s1 + $0xa0] sm:$0xff]
  %v66 = vld [vmem:[%s1 + $0xa8] sm:$0xff]
  %v67 = vld [vmem:[%s1 + $0xb0] sm:$0xff]
  %v68 = vld [vmem:[%s1 + $0xb8] sm:$0xff]
  %v69 = vld [vmem:[%s1 + $0xc0] sm:$0x3]
  %v70 = vld [vmem:[%s1 + $0xc8] sm:$0x3]
  %v71 = vld [vmem:[%s1 + $0xd0] sm:$0x3]
  %v72 = vld [vmem:[%s1 + $0xd8] sm:$0x3]
  %v73 = vld [vmem:[%s2] sm:$0xf]
  %v75 = vperm.slane %v73, 0
  %v76 = vperm.slane %v73, 1
  %v77 = vperm.slane %v73, 2
  %v78 = vperm.slane %v73, 3
  %vm83 = vcmask 408576
  %v85 = vsel %vm83, %v20, 0
  %v88 = vsel %vm83, %v21, 0
  %v91 = vsel %vm83, %v22, 0
  %v94 = vsel %vm83, %v23, 0
  %v97 = vsel %vm83, %v24, 0
  %v100 = vsel %vm83, %v25, 0
  %v103 = vsel %vm83, %v26, 0
  %v106 = vsel %vm83, %v27, 0
  %v109 = vsel %vm83, %v28, 0
  %v112 = vsel %vm83, %v29, 0
  %v115 = vsel %vm83, %v30, 0
  %v118 = vsel %vm83, %v31, 0
  %v121 = vsel %vm83, %v32, 0
  %v124 = vsel %vm83, %v33, 0
  %v127 = vsel %vm83, %v34, 0
  %v130 = vsel %vm83, %v35, 0
  %v133 = vsel %vm83, %v36, 0
  %v136 = vsel %vm83, %v37, 0
  %v139 = vsel %vm83, %v38, 0
  %v142 = vsel %vm83, %v39, 0
  %v145 = vsel %vm83, %v40, 0
  %v148 = vsel %vm83, %v41, 0
  %v151 = vsel %vm83, %v42, 0
  %v154 = vsel %vm83, %v43, 0
  %v157 = vsel %vm83, %v44, 0
  %vm159 = vcmask 1041408
  %v161 = vsel %vm159, %v69, 0
  %v164 = vsel %vm159, %v70, 0
  %v167 = vsel %vm159, %v71, 0
  %v170 = vsel %vm159, %v72, 0
  %172 = vmatpush.msra.mxu0 0.0
  %173 = vmatpush.msra.mxu0 0.0
  %174 = vmatpush.msra.mxu0 0.0
  %175 = vmatpush.msra.mxu0 0.0
  %176 = vmatpush.msra.mxu0 0.0
  %177 = vmatpush.msra.mxu0 0.0
  %178 = vmatpush.msra.mxu0 0.0
  %179 = vmatpush.msra.mxu0 0.0
  %180 = vmatpush.msra.mxu0 0.0
  %181 = vmatpush.msra.mxu0 %v161
  %182 = vmatpush.msra.mxu0 %v65
  %183 = vmatpush.msra.mxu0 %v61
  %184 = vmatpush.msra.mxu0 %v57
  %185 = vmatpush.msra.mxu0 %v53
  %186 = vmatpush.msra.mxu0 %v49
  %187 = vmatpush.msra.mxu0 %v45
  %188 = vmatmul.f32.gmra.mxu0 %v85
  %v189 = vpop.f32.mrf.mxu0
  %v190 = vadd.f32 %v75, %v189
  %191 = vmatmul.f32.gmra.mxu0 %v88
  %v192 = vpop.f32.mrf.mxu0
  %v193 = vadd.f32 %v75, %v192
  %194 = vmatmul.f32.gmra.mxu0 %v91
  %v195 = vpop.f32.mrf.mxu0
  %v196 = vadd.f32 %v75, %v195
  %197 = vmatmul.f32.gmra.mxu0 %v94
  %v198 = vpop.f32.mrf.mxu0
  %v199 = vadd.f32 %v75, %v198
  %200 = vmatmul.f32.gmra.mxu0 %v97
  %v201 = vpop.f32.mrf.mxu0
  %v202 = vadd.f32 %v75, %v201
  %203 = vmatmul.f32.gmra.mxu0 %v100
  %v204 = vpop.f32.mrf.mxu0
  %v205 = vadd.f32 %v75, %v204
  %206 = vmatmul.f32.gmra.mxu0 %v103
  %v207 = vpop.f32.mrf.mxu0
  %v208 = vadd.f32 %v75, %v207
  %209 = vmatmul.f32.gmra.mxu0 %v106
  %v210 = vpop.f32.mrf.mxu0
  %v211 = vadd.f32 %v75, %v210
  %212 = vmatmul.f32.gmra.mxu0 %v109
  %v213 = vpop.f32.mrf.mxu0
  %v214 = vadd.f32 %v75, %v213
  %215 = vmatmul.f32.gmra.mxu0 %v112
  %v216 = vpop.f32.mrf.mxu0
  %v217 = vadd.f32 %v75, %v216
  %218 = vmatmul.f32.gmra.mxu0 %v115
  %v219 = vpop.f32.mrf.mxu0
  %v220 = vadd.f32 %v75, %v219
  %221 = vmatmul.f32.gmra.mxu0 %v118
  %v222 = vpop.f32.mrf.mxu0
  %v223 = vadd.f32 %v75, %v222
  %224 = vmatmul.f32.gmra.mxu0 %v121
  %v225 = vpop.f32.mrf.mxu0
  %v226 = vadd.f32 %v75, %v225
  %227 = vmatmul.f32.gmra.mxu0 %v124
  %v228 = vpop.f32.mrf.mxu0
  %v229 = vadd.f32 %v75, %v228
  %230 = vmatmul.f32.gmra.mxu0 %v127
  %v231 = vpop.f32.mrf.mxu0
  %v232 = vadd.f32 %v75, %v231
  %233 = vmatmul.f32.gmra.mxu0 %v130
  %v234 = vpop.f32.mrf.mxu0
  %v235 = vadd.f32 %v75, %v234
  %236 = vmatmul.f32.gmra.mxu0 %v133
  %v237 = vpop.f32.mrf.mxu0
  %v238 = vadd.f32 %v75, %v237
  %239 = vmatmul.f32.gmra.mxu0 %v136
  %v240 = vpop.f32.mrf.mxu0
  %v241 = vadd.f32 %v75, %v240
  %242 = vmatmul.f32.gmra.mxu0 %v139
  %v243 = vpop.f32.mrf.mxu0
  %v244 = vadd.f32 %v75, %v243
  %245 = vmatmul.f32.gmra.mxu0 %v142
  %v246 = vpop.f32.mrf.mxu0
  %v247 = vadd.f32 %v75, %v246
  %248 = vmatmul.f32.gmra.mxu0 %v145
  %v249 = vpop.f32.mrf.mxu0
  %v250 = vadd.f32 %v75, %v249
  %251 = vmatmul.f32.gmra.mxu0 %v148
  %v252 = vpop.f32.mrf.mxu0
  %v253 = vadd.f32 %v75, %v252
  %254 = vmatmul.f32.gmra.mxu0 %v151
  %v255 = vpop.f32.mrf.mxu0
  %v256 = vadd.f32 %v75, %v255
  %257 = vmatmul.f32.gmra.mxu0 %v154
  %v258 = vpop.f32.mrf.mxu0
  %v259 = vadd.f32 %v75, %v258
  %260 = vmatmul.f32.gmra.mxu0 %v157
  %v261 = vpop.f32.mrf.mxu0
  %v262 = vadd.f32 %v75, %v261
  %263 = vdwg.mxu0
  %264 = vmatpush.msra.mxu0 0.0
  %265 = vmatpush.msra.mxu0 0.0
  %266 = vmatpush.msra.mxu0 0.0
  %267 = vmatpush.msra.mxu0 0.0
  %268 = vmatpush.msra.mxu0 0.0
  %269 = vmatpush.msra.mxu0 0.0
  %270 = vmatpush.msra.mxu0 0.0
  %271 = vmatpush.msra.mxu0 0.0
  %272 = vmatpush.msra.mxu0 0.0
  %273 = vmatpush.msra.mxu0 %v164
  %274 = vmatpush.msra.mxu0 %v66
  %275 = vmatpush.msra.mxu0 %v62
  %276 = vmatpush.msra.mxu0 %v58
  %277 = vmatpush.msra.mxu0 %v54
  %278 = vmatpush.msra.mxu0 %v50
  %279 = vmatpush.msra.mxu0 %v46
  %280 = vmatmul.f32.gmra.mxu0 %v85
  %v281 = vpop.f32.mrf.mxu0
  %v282 = vadd.f32 %v76, %v281
  %283 = vmatmul.f32.gmra.mxu0 %v88
  %v284 = vpop.f32.mrf.mxu0
  %v285 = vadd.f32 %v76, %v284
  %286 = vmatmul.f32.gmra.mxu0 %v91
  %v287 = vpop.f32.mrf.mxu0
  %v288 = vadd.f32 %v76, %v287
  %289 = vmatmul.f32.gmra.mxu0 %v94
  %v290 = vpop.f32.mrf.mxu0
  %v291 = vadd.f32 %v76, %v290
  %292 = vmatmul.f32.gmra.mxu0 %v97
  %v293 = vpop.f32.mrf.mxu0
  %v294 = vadd.f32 %v76, %v293
  %295 = vmatmul.f32.gmra.mxu0 %v100
  %v296 = vpop.f32.mrf.mxu0
  %v297 = vadd.f32 %v76, %v296
  %298 = vmatmul.f32.gmra.mxu0 %v103
  %v299 = vpop.f32.mrf.mxu0
  %v300 = vadd.f32 %v76, %v299
  %301 = vmatmul.f32.gmra.mxu0 %v106
  %v302 = vpop.f32.mrf.mxu0
  %v303 = vadd.f32 %v76, %v302
  %304 = vmatmul.f32.gmra.mxu0 %v109
  %v305 = vpop.f32.mrf.mxu0
  %v306 = vadd.f32 %v76, %v305
  %307 = vmatmul.f32.gmra.mxu0 %v112
  %v308 = vpop.f32.mrf.mxu0
  %v309 = vadd.f32 %v76, %v308
  %310 = vmatmul.f32.gmra.mxu0 %v115
  %v311 = vpop.f32.mrf.mxu0
  %v312 = vadd.f32 %v76, %v311
  %313 = vmatmul.f32.gmra.mxu0 %v118
  %v314 = vpop.f32.mrf.mxu0
  %v315 = vadd.f32 %v76, %v314
  %316 = vmatmul.f32.gmra.mxu0 %v121
  %v317 = vpop.f32.mrf.mxu0
  %v318 = vadd.f32 %v76, %v317
  %319 = vmatmul.f32.gmra.mxu0 %v124
  %v320 = vpop.f32.mrf.mxu0
  %v321 = vadd.f32 %v76, %v320
  %322 = vmatmul.f32.gmra.mxu0 %v127
  %v323 = vpop.f32.mrf.mxu0
  %v324 = vadd.f32 %v76, %v323
  %325 = vmatmul.f32.gmra.mxu0 %v130
  %v326 = vpop.f32.mrf.mxu0
  %v327 = vadd.f32 %v76, %v326
  %328 = vmatmul.f32.gmra.mxu0 %v133
  %v329 = vpop.f32.mrf.mxu0
  %v330 = vadd.f32 %v76, %v329
  %331 = vmatmul.f32.gmra.mxu0 %v136
  %v332 = vpop.f32.mrf.mxu0
  %v333 = vadd.f32 %v76, %v332
  %334 = vmatmul.f32.gmra.mxu0 %v139
  %v335 = vpop.f32.mrf.mxu0
  %v336 = vadd.f32 %v76, %v335
  %337 = vmatmul.f32.gmra.mxu0 %v142
  %v338 = vpop.f32.mrf.mxu0
  %v339 = vadd.f32 %v76, %v338
  %340 = vmatmul.f32.gmra.mxu0 %v145
  %v341 = vpop.f32.mrf.mxu0
  %v342 = vadd.f32 %v76, %v341
  %343 = vmatmul.f32.gmra.mxu0 %v148
  %v344 = vpop.f32.mrf.mxu0
  %v345 = vadd.f32 %v76, %v344
  %346 = vmatmul.f32.gmra.mxu0 %v151
  %v347 = vpop.f32.mrf.mxu0
  %v348 = vadd.f32 %v76, %v347
  %349 = vmatmul.f32.gmra.mxu0 %v154
  %v350 = vpop.f32.mrf.mxu0
  %v351 = vadd.f32 %v76, %v350
  %352 = vmatmul.f32.gmra.mxu0 %v157
  %v353 = vpop.f32.mrf.mxu0
  %v354 = vadd.f32 %v76, %v353
  %355 = vdwg.mxu0
  %356 = vmatpush.msra.mxu0 0.0
  %357 = vmatpush.msra.mxu0 0.0
  %358 = vmatpush.msra.mxu0 0.0
  %359 = vmatpush.msra.mxu0 0.0
  %360 = vmatpush.msra.mxu0 0.0
  %361 = vmatpush.msra.mxu0 0.0
  %362 = vmatpush.msra.mxu0 0.0
  %363 = vmatpush.msra.mxu0 0.0
  %364 = vmatpush.msra.mxu0 0.0
  %365 = vmatpush.msra.mxu0 %v167
  %366 = vmatpush.msra.mxu0 %v67
  %367 = vmatpush.msra.mxu0 %v63
  %368 = vmatpush.msra.mxu0 %v59
  %369 = vmatpush.msra.mxu0 %v55
  %370 = vmatpush.msra.mxu0 %v51
  %371 = vmatpush.msra.mxu0 %v47
  %372 = vmatmul.f32.gmra.mxu0 %v85
  %v373 = vpop.f32.mrf.mxu0
  %v374 = vadd.f32 %v77, %v373
  %375 = vmatmul.f32.gmra.mxu0 %v88
  %v376 = vpop.f32.mrf.mxu0
  %v377 = vadd.f32 %v77, %v376
  %378 = vmatmul.f32.gmra.mxu0 %v91
  %v379 = vpop.f32.mrf.mxu0
  %v380 = vadd.f32 %v77, %v379
  %381 = vmatmul.f32.gmra.mxu0 %v94
  %v382 = vpop.f32.mrf.mxu0
  %v383 = vadd.f32 %v77, %v382
  %384 = vmatmul.f32.gmra.mxu0 %v97
  %v385 = vpop.f32.mrf.mxu0
  %v386 = vadd.f32 %v77, %v385
  %387 = vmatmul.f32.gmra.mxu0 %v100
  %v388 = vpop.f32.mrf.mxu0
  %v389 = vadd.f32 %v77, %v388
  %390 = vmatmul.f32.gmra.mxu0 %v103
  %v391 = vpop.f32.mrf.mxu0
  %v392 = vadd.f32 %v77, %v391
  %393 = vmatmul.f32.gmra.mxu0 %v106
  %v394 = vpop.f32.mrf.mxu0
  %v395 = vadd.f32 %v77, %v394
  %396 = vmatmul.f32.gmra.mxu0 %v109
  %v397 = vpop.f32.mrf.mxu0
  %v398 = vadd.f32 %v77, %v397
  %399 = vmatmul.f32.gmra.mxu0 %v112
  %v400 = vpop.f32.mrf.mxu0
  %v401 = vadd.f32 %v77, %v400
  %402 = vmatmul.f32.gmra.mxu0 %v115
  %v403 = vpop.f32.mrf.mxu0
  %v404 = vadd.f32 %v77, %v403
  %405 = vmatmul.f32.gmra.mxu0 %v118
  %v406 = vpop.f32.mrf.mxu0
  %v407 = vadd.f32 %v77, %v406
  %408 = vmatmul.f32.gmra.mxu0 %v121
  %v409 = vpop.f32.mrf.mxu0
  %v410 = vadd.f32 %v77, %v409
  %411 = vmatmul.f32.gmra.mxu0 %v124
  %v412 = vpop.f32.mrf.mxu0
  %v413 = vadd.f32 %v77, %v412
  %414 = vmatmul.f32.gmra.mxu0 %v127
  %v415 = vpop.f32.mrf.mxu0
  %v416 = vadd.f32 %v77, %v415
  %417 = vmatmul.f32.gmra.mxu0 %v130
  %v418 = vpop.f32.mrf.mxu0
  %v419 = vadd.f32 %v77, %v418
  %420 = vmatmul.f32.gmra.mxu0 %v133
  %v421 = vpop.f32.mrf.mxu0
  %v422 = vadd.f32 %v77, %v421
  %423 = vmatmul.f32.gmra.mxu0 %v136
  %v424 = vpop.f32.mrf.mxu0
  %v425 = vadd.f32 %v77, %v424
  %426 = vmatmul.f32.gmra.mxu0 %v139
  %v427 = vpop.f32.mrf.mxu0
  %v428 = vadd.f32 %v77, %v427
  %429 = vmatmul.f32.gmra.mxu0 %v142
  %v430 = vpop.f32.mrf.mxu0
  %v431 = vadd.f32 %v77, %v430
  %432 = vmatmul.f32.gmra.mxu0 %v145
  %v433 = vpop.f32.mrf.mxu0
  %v434 = vadd.f32 %v77, %v433
  %435 = vmatmul.f32.gmra.mxu0 %v148
  %v436 = vpop.f32.mrf.mxu0
  %v437 = vadd.f32 %v77, %v436
  %438 = vmatmul.f32.gmra.mxu0 %v151
  %v439 = vpop.f32.mrf.mxu0
  %v440 = vadd.f32 %v77, %v439
  %441 = vmatmul.f32.gmra.mxu0 %v154
  %v442 = vpop.f32.mrf.mxu0
  %v443 = vadd.f32 %v77, %v442
  %444 = vmatmul.f32.gmra.mxu0 %v157
  %v445 = vpop.f32.mrf.mxu0
  %v446 = vadd.f32 %v77, %v445
  %447 = vdwg.mxu0
  %448 = vmatpush.msra.mxu0 0.0
  %449 = vmatpush.msra.mxu0 0.0
  %450 = vmatpush.msra.mxu0 0.0
  %451 = vmatpush.msra.mxu0 0.0
  %452 = vmatpush.msra.mxu0 0.0
  %453 = vmatpush.msra.mxu0 0.0
  %454 = vmatpush.msra.mxu0 0.0
  %455 = vmatpush.msra.mxu0 0.0
  %456 = vmatpush.msra.mxu0 0.0
  %457 = vmatpush.msra.mxu0 %v170
  %458 = vmatpush.msra.mxu0 %v68
  %459 = vmatpush.msra.mxu0 %v64
  %460 = vmatpush.msra.mxu0 %v60
  %461 = vmatpush.msra.mxu0 %v56
  %462 = vmatpush.msra.mxu0 %v52
  %463 = vmatpush.msra.mxu0 %v48
  %464 = vmatmul.f32.gmra.mxu0 %v85
  %v465 = vpop.f32.mrf.mxu0
  %v466 = vadd.f32 %v78, %v465
  %467 = vmatmul.f32.gmra.mxu0 %v88
  %v468 = vpop.f32.mrf.mxu0
  %v469 = vadd.f32 %v78, %v468
  %470 = vmatmul.f32.gmra.mxu0 %v91
  %v471 = vpop.f32.mrf.mxu0
  %v472 = vadd.f32 %v78, %v471
  %473 = vmatmul.f32.gmra.mxu0 %v94
  %v474 = vpop.f32.mrf.mxu0
  %v475 = vadd.f32 %v78, %v474
  %476 = vmatmul.f32.gmra.mxu0 %v97
  %v477 = vpop.f32.mrf.mxu0
  %v478 = vadd.f32 %v78, %v477
  %479 = vmatmul.f32.gmra.mxu0 %v100
  %v480 = vpop.f32.mrf.mxu0
  %v481 = vadd.f32 %v78, %v480
  %482 = vmatmul.f32.gmra.mxu0 %v103
  %v483 = vpop.f32.mrf.mxu0
  %v484 = vadd.f32 %v78, %v483
  %485 = vmatmul.f32.gmra.mxu0 %v106
  %v486 = vpop.f32.mrf.mxu0
  %v487 = vadd.f32 %v78, %v486
  %488 = vmatmul.f32.gmra.mxu0 %v109
  %v489 = vpop.f32.mrf.mxu0
  %v490 = vadd.f32 %v78, %v489
  %491 = vmatmul.f32.gmra.mxu0 %v112
  %v492 = vpop.f32.mrf.mxu0
  %v493 = vadd.f32 %v78, %v492
  %494 = vmatmul.f32.gmra.mxu0 %v115
  %v495 = vpop.f32.mrf.mxu0
  %v496 = vadd.f32 %v78, %v495
  %497 = vmatmul.f32.gmra.mxu0 %v118
  %v498 = vpop.f32.mrf.mxu0
  %v499 = vadd.f32 %v78, %v498
  %500 = vmatmul.f32.gmra.mxu0 %v121
  %v501 = vpop.f32.mrf.mxu0
  %v502 = vadd.f32 %v78, %v501
  %503 = vmatmul.f32.gmra.mxu0 %v124
  %v504 = vpop.f32.mrf.mxu0
  %v505 = vadd.f32 %v78, %v504
  %506 = vmatmul.f32.gmra.mxu0 %v127
  %v507 = vpop.f32.mrf.mxu0
  %v508 = vadd.f32 %v78, %v507
  %509 = vmatmul.f32.gmra.mxu0 %v130
  %v510 = vpop.f32.mrf.mxu0
  %v511 = vadd.f32 %v78, %v510
  %512 = vmatmul.f32.gmra.mxu0 %v133
  %v513 = vpop.f32.mrf.mxu0
  %v514 = vadd.f32 %v78, %v513
  %515 = vmatmul.f32.gmra.mxu0 %v136
  %v516 = vpop.f32.mrf.mxu0
  %v517 = vadd.f32 %v78, %v516
  %518 = vmatmul.f32.gmra.mxu0 %v139
  %v519 = vpop.f32.mrf.mxu0
  %v520 = vadd.f32 %v78, %v519
  %521 = vmatmul.f32.gmra.mxu0 %v142
  %v522 = vpop.f32.mrf.mxu0
  %v523 = vadd.f32 %v78, %v522
  %524 = vmatmul.f32.gmra.mxu0 %v145
  %v525 = vpop.f32.mrf.mxu0
  %v526 = vadd.f32 %v78, %v525
  %527 = vmatmul.f32.gmra.mxu0 %v148
  %v528 = vpop.f32.mrf.mxu0
  %v529 = vadd.f32 %v78, %v528
  %530 = vmatmul.f32.gmra.mxu0 %v151
  %v531 = vpop.f32.mrf.mxu0
  %v532 = vadd.f32 %v78, %v531
  %533 = vmatmul.f32.gmra.mxu0 %v154
  %v534 = vpop.f32.mrf.mxu0
  %v535 = vadd.f32 %v78, %v534
  %536 = vmatmul.f32.gmra.mxu0 %v157
  %v537 = vpop.f32.mrf.mxu0
  %v538 = vadd.f32 %v78, %v537
  %539 = vdwg.mxu0
  %v540 = vmax.f32 %v190, 0.0
  %v541 = vmax.f32 %v282, 0.0
  %v542 = vmax.f32 %v374, 0.0
  %v543 = vmax.f32 %v466, 0.0
  %v544 = vmax.f32 %v193, 0.0
  %v545 = vmax.f32 %v285, 0.0
  %v546 = vmax.f32 %v377, 0.0
  %v547 = vmax.f32 %v469, 0.0
  %v548 = vmax.f32 %v196, 0.0
  %v549 = vmax.f32 %v288, 0.0
  %v550 = vmax.f32 %v380, 0.0
  %v551 = vmax.f32 %v472, 0.0
  %v552 = vmax.f32 %v199, 0.0
  %v553 = vmax.f32 %v291, 0.0
  %v554 = vmax.f32 %v383, 0.0
  %v555 = vmax.f32 %v475, 0.0
  %v556 = vmax.f32 %v202, 0.0
  %v557 = vmax.f32 %v294, 0.0
  %v558 = vmax.f32 %v386, 0.0
  %v559 = vmax.f32 %v478, 0.0
  %v560 = vmax.f32 %v205, 0.0
  %v561 = vmax.f32 %v297, 0.0
  %v562 = vmax.f32 %v389, 0.0
  %v563 = vmax.f32 %v481, 0.0
  %v564 = vmax.f32 %v208, 0.0
  %v565 = vmax.f32 %v300, 0.0
  %v566 = vmax.f32 %v392, 0.0
  %v567 = vmax.f32 %v484, 0.0
  %v568 = vmax.f32 %v211, 0.0
  %v569 = vmax.f32 %v303, 0.0
  %v570 = vmax.f32 %v395, 0.0
  %v571 = vmax.f32 %v487, 0.0
  %v572 = vmax.f32 %v214, 0.0
  %v573 = vmax.f32 %v306, 0.0
  %v574 = vmax.f32 %v398, 0.0
  %v575 = vmax.f32 %v490, 0.0
  %v576 = vmax.f32 %v217, 0.0
  %v577 = vmax.f32 %v309, 0.0
  %v578 = vmax.f32 %v401, 0.0
  %v579 = vmax.f32 %v493, 0.0
  %v580 = vmax.f32 %v220, 0.0
  %v581 = vmax.f32 %v312, 0.0
  %v582 = vmax.f32 %v404, 0.0
  %v583 = vmax.f32 %v496, 0.0
  %v584 = vmax.f32 %v223, 0.0
  %v585 = vmax.f32 %v315, 0.0
  %v586 = vmax.f32 %v407, 0.0
  %v587 = vmax.f32 %v499, 0.0
  %v588 = vmax.f32 %v226, 0.0
  %v589 = vmax.f32 %v318, 0.0
  %v590 = vmax.f32 %v410, 0.0
  %v591 = vmax.f32 %v502, 0.0
  %v592 = vmax.f32 %v229, 0.0
  %v593 = vmax.f32 %v321, 0.0
  %v594 = vmax.f32 %v413, 0.0
  %v595 = vmax.f32 %v505, 0.0
  %v596 = vmax.f32 %v232, 0.0
  %v597 = vmax.f32 %v324, 0.0
  %v598 = vmax.f32 %v416, 0.0
  %v599 = vmax.f32 %v508, 0.0
  %v600 = vmax.f32 %v235, 0.0
  %v601 = vmax.f32 %v327, 0.0
  %v602 = vmax.f32 %v419, 0.0
  %v603 = vmax.f32 %v511, 0.0
  %v604 = vmax.f32 %v238, 0.0
  %v605 = vmax.f32 %v330, 0.0
  %v606 = vmax.f32 %v422, 0.0
  %v607 = vmax.f32 %v514, 0.0
  %v608 = vmax.f32 %v241, 0.0
  %v609 = vmax.f32 %v333, 0.0
  %v610 = vmax.f32 %v425, 0.0
  %v611 = vmax.f32 %v517, 0.0
  %v612 = vmax.f32 %v244, 0.0
  %v613 = vmax.f32 %v336, 0.0
  %v614 = vmax.f32 %v428, 0.0
  %v615 = vmax.f32 %v520, 0.0
  %v616 = vmax.f32 %v247, 0.0
  %v617 = vmax.f32 %v339, 0.0
  %v618 = vmax.f32 %v431, 0.0
  %v619 = vmax.f32 %v523, 0.0
  %v620 = vmax.f32 %v250, 0.0
  %v621 = vmax.f32 %v342, 0.0
  %v622 = vmax.f32 %v434, 0.0
  %v623 = vmax.f32 %v526, 0.0
  %v624 = vmax.f32 %v253, 0.0
  %v625 = vmax.f32 %v345, 0.0
  %v626 = vmax.f32 %v437, 0.0
  %v627 = vmax.f32 %v529, 0.0
  %v628 = vmax.f32 %v256, 0.0
  %v629 = vmax.f32 %v348, 0.0
  %v630 = vmax.f32 %v440, 0.0
  %v631 = vmax.f32 %v532, 0.0
  %v632 = vmax.f32 %v259, 0.0
  %v633 = vmax.f32 %v351, 0.0
  %v634 = vmax.f32 %v443, 0.0
  %v635 = vmax.f32 %v535, 0.0
  %v636 = vmax.f32 %v262, 0.0
  %v637 = vmax.f32 %v354, 0.0
  %v638 = vmax.f32 %v446, 0.0
  %v639 = vmax.f32 %v538, 0.0
  %v640 = vld [vmem:[%s3] sm:$0xff]
  %v641 = vld [vmem:[%s3 + $0x8] sm:$0xff]
  %v642 = vld [vmem:[%s3 + $0x10] sm:$0xff]
  %v643 = vld [vmem:[%s3 + $0x18] sm:$0xff]
  %v644 = vld [vmem:[%s3 + $0x20] sm:$0xff]
  %v645 = vld [vmem:[%s3 + $0x28] sm:$0xff]
  %v646 = vld [vmem:[%s3 + $0x30] sm:$0xff]
  %v647 = vld [vmem:[%s3 + $0x38] sm:$0xff]
  %v648 = vld [vmem:[%s3 + $0x40] sm:$0xff]
  %v649 = vld [vmem:[%s3 + $0x48] sm:$0xff]
  %v650 = vld [vmem:[%s3 + $0x50] sm:$0xff]
  %v651 = vld [vmem:[%s3 + $0x58] sm:$0xff]
  %v652 = vld [vmem:[%s3 + $0x60] sm:$0xff]
  %v653 = vld [vmem:[%s3 + $0x68] sm:$0xff]
  %v654 = vld [vmem:[%s3 + $0x70] sm:$0xff]
  %v655 = vld [vmem:[%s3 + $0x78] sm:$0xff]
  %v656 = vld [vmem:[%s3 + $0x80] sm:$0xff]
  %v657 = vld [vmem:[%s3 + $0x88] sm:$0xff]
  %v658 = vld [vmem:[%s3 + $0x90] sm:$0xff]
  %v659 = vld [vmem:[%s3 + $0x98] sm:$0xff]
  %v660 = vld [vmem:[%s3 + $0xa0] sm:$0xff]
  %v661 = vld [vmem:[%s3 + $0xa8] sm:$0xff]
  %v662 = vld [vmem:[%s3 + $0xb0] sm:$0xff]
  %v663 = vld [vmem:[%s3 + $0xb8] sm:$0xff]
  %v664 = vld [vmem:[%s3 + $0xc0] sm:$0xff]
  %v665 = vld [vmem:[%s3 + $0xc8] sm:$0xff]
  %v666 = vld [vmem:[%s3 + $0xd0] sm:$0xff]
  %v667 = vld [vmem:[%s3 + $0xd8] sm:$0xff]
  %v668 = vld [vmem:[%s3 + $0xe0] sm:$0xff]
  %v669 = vld [vmem:[%s3 + $0xe8] sm:$0xff]
  %v670 = vld [vmem:[%s3 + $0xf0] sm:$0xff]
  %v671 = vld [vmem:[%s3 + $0xf8] sm:$0xff]
  %v672 = vld [vmem:[%s3 + $0x100] sm:$0xff]
  %v673 = vld [vmem:[%s3 + $0x108] sm:$0xff]
  %v674 = vld [vmem:[%s3 + $0x110] sm:$0xff]
  %v675 = vld [vmem:[%s3 + $0x118] sm:$0xff]
  %v676 = vld [vmem:[%s3 + $0x120] sm:$0xff]
  %v677 = vld [vmem:[%s3 + $0x128] sm:$0xff]
  %v678 = vld [vmem:[%s3 + $0x130] sm:$0xff]
  %v679 = vld [vmem:[%s3 + $0x138] sm:$0xff]
  %v680 = vld [vmem:[%s3 + $0x140] sm:$0xff]
  %v681 = vld [vmem:[%s3 + $0x148] sm:$0xff]
  %v682 = vld [vmem:[%s3 + $0x150] sm:$0xff]
  %v683 = vld [vmem:[%s3 + $0x158] sm:$0xff]
  %v684 = vld [vmem:[%s3 + $0x160] sm:$0xff]
  %v685 = vld [vmem:[%s3 + $0x168] sm:$0xff]
  %v686 = vld [vmem:[%s3 + $0x170] sm:$0xff]
  %v687 = vld [vmem:[%s3 + $0x178] sm:$0xff]
  %v688 = vld [vmem:[%s3 + $0x180] sm:$0xff]
  %v689 = vld [vmem:[%s3 + $0x188] sm:$0xff]
  %v690 = vld [vmem:[%s3 + $0x190] sm:$0xff]
  %v691 = vld [vmem:[%s3 + $0x198] sm:$0xff]
  %v692 = vld [vmem:[%s3 + $0x1a0] sm:$0xff]
  %v693 = vld [vmem:[%s3 + $0x1a8] sm:$0xff]
  %v694 = vld [vmem:[%s3 + $0x1b0] sm:$0xff]
  %v695 = vld [vmem:[%s3 + $0x1b8] sm:$0xff]
  %v696 = vld [vmem:[%s3 + $0x1c0] sm:$0xff]
  %v697 = vld [vmem:[%s3 + $0x1c8] sm:$0xff]
  %v698 = vld [vmem:[%s3 + $0x1d0] sm:$0xff]
  %v699 = vld [vmem:[%s3 + $0x1d8] sm:$0xff]
  %v700 = vld [vmem:[%s3 + $0x1e0] sm:$0xff]
  %v701 = vld [vmem:[%s3 + $0x1e8] sm:$0xff]
  %v702 = vld [vmem:[%s3 + $0x1f0] sm:$0xff]
  %v703 = vld [vmem:[%s3 + $0x1f8] sm:$0xff]
  %v704 = vld [vmem:[%s4] sm:$0x1]
  %v706 = vperm.slane %v704, 0
  %708 = vmatpush.msra.mxu0 %v655
  %709 = vmatpush.msra.mxu0 %v654
  %710 = vmatpush.msra.mxu0 %v653
  %711 = vmatpush.msra.mxu0 %v652
  %712 = vmatpush.msra.mxu0 %v651
  %713 = vmatpush.msra.mxu0 %v650
  %714 = vmatpush.msra.mxu0 %v649
  %715 = vmatpush.msra.mxu0 %v648
  %716 = vmatpush.msra.mxu0 %v647
  %717 = vmatpush.msra.mxu0 %v646
  %718 = vmatpush.msra.mxu0 %v645
  %719 = vmatpush.msra.mxu0 %v644
  %720 = vmatpush.msra.mxu0 %v643
  %721 = vmatpush.msra.mxu0 %v642
  %722 = vmatpush.msra.mxu0 %v641
  %723 = vmatpush.msra.mxu0 %v640
  %724 = vmatmul.f32.gmra.mxu0 %v540
  %v725 = vpop.f32.mrf.mxu0
  %v726 = vadd.f32 %v706, %v725
  %727 = vmatmul.f32.gmra.mxu0 %v544
  %v728 = vpop.f32.mrf.mxu0
  %v729 = vadd.f32 %v706, %v728
  %730 = vmatmul.f32.gmra.mxu0 %v548
  %v731 = vpop.f32.mrf.mxu0
  %v732 = vadd.f32 %v706, %v731
  %733 = vmatmul.f32.gmra.mxu0 %v552
  %v734 = vpop.f32.mrf.mxu0
  %v735 = vadd.f32 %v706, %v734
  %736 = vmatmul.f32.gmra.mxu0 %v556
  %v737 = vpop.f32.mrf.mxu0
  %v738 = vadd.f32 %v706, %v737
  %739 = vmatmul.f32.gmra.mxu0 %v560
  %v740 = vpop.f32.mrf.mxu0
  %v741 = vadd.f32 %v706, %v740
  %742 = vmatmul.f32.gmra.mxu0 %v564
  %v743 = vpop.f32.mrf.mxu0
  %v744 = vadd.f32 %v706, %v743
  %745 = vmatmul.f32.gmra.mxu0 %v568
  %v746 = vpop.f32.mrf.mxu0
  %v747 = vadd.f32 %v706, %v746
  %748 = vmatmul.f32.gmra.mxu0 %v572
  %v749 = vpop.f32.mrf.mxu0
  %v750 = vadd.f32 %v706, %v749
  %751 = vmatmul.f32.gmra.mxu0 %v576
  %v752 = vpop.f32.mrf.mxu0
  %v753 = vadd.f32 %v706, %v752
  %754 = vmatmul.f32.gmra.mxu0 %v580
  %v755 = vpop.f32.mrf.mxu0
  %v756 = vadd.f32 %v706, %v755
  %757 = vmatmul.f32.gmra.mxu0 %v584
  %v758 = vpop.f32.mrf.mxu0
  %v759 = vadd.f32 %v706, %v758
  %760 = vmatmul.f32.gmra.mxu0 %v588
  %v761 = vpop.f32.mrf.mxu0
  %v762 = vadd.f32 %v706, %v761
  %763 = vmatmul.f32.gmra.mxu0 %v592
  %v764 = vpop.f32.mrf.mxu0
  %v765 = vadd.f32 %v706, %v764
  %766 = vmatmul.f32.gmra.mxu0 %v596
  %v767 = vpop.f32.mrf.mxu0
  %v768 = vadd.f32 %v706, %v767
  %769 = vmatmul.f32.gmra.mxu0 %v600
  %v770 = vpop.f32.mrf.mxu0
  %v771 = vadd.f32 %v706, %v770
  %772 = vmatmul.f32.gmra.mxu0 %v604
  %v773 = vpop.f32.mrf.mxu0
  %v774 = vadd.f32 %v706, %v773
  %775 = vmatmul.f32.gmra.mxu0 %v608
  %v776 = vpop.f32.mrf.mxu0
  %v777 = vadd.f32 %v706, %v776
  %778 = vmatmul.f32.gmra.mxu0 %v612
  %v779 = vpop.f32.mrf.mxu0
  %v780 = vadd.f32 %v706, %v779
  %781 = vmatmul.f32.gmra.mxu0 %v616
  %v782 = vpop.f32.mrf.mxu0
  %v783 = vadd.f32 %v706, %v782
  %784 = vmatmul.f32.gmra.mxu0 %v620
  %v785 = vpop.f32.mrf.mxu0
  %v786 = vadd.f32 %v706, %v785
  %787 = vmatmul.f32.gmra.mxu0 %v624
  %v788 = vpop.f32.mrf.mxu0
  %v789 = vadd.f32 %v706, %v788
  %790 = vmatmul.f32.gmra.mxu0 %v628
  %v791 = vpop.f32.mrf.mxu0
  %v792 = vadd.f32 %v706, %v791
  %793 = vmatmul.f32.gmra.mxu0 %v632
  %v794 = vpop.f32.mrf.mxu0
  %v795 = vadd.f32 %v706, %v794
  %796 = vmatmul.f32.gmra.mxu0 %v636
  %v797 = vpop.f32.mrf.mxu0
  %v798 = vadd.f32 %v706, %v797
  %799 = vdwg.mxu0
  %800 = vmatpush.msra.mxu0 %v671
  %801 = vmatpush.msra.mxu0 %v670
  %802 = vmatpush.msra.mxu0 %v669
  %803 = vmatpush.msra.mxu0 %v668
  %804 = vmatpush.msra.mxu0 %v667
  %805 = vmatpush.msra.mxu0 %v666
  %806 = vmatpush.msra.mxu0 %v665
  %807 = vmatpush.msra.mxu0 %v664
  %808 = vmatpush.msra.mxu0 %v663
  %809 = vmatpush.msra.mxu0 %v662
  %810 = vmatpush.msra.mxu0 %v661
  %811 = vmatpush.msra.mxu0 %v660
  %812 = vmatpush.msra.mxu0 %v659
  %813 = vmatpush.msra.mxu0 %v658
  %814 = vmatpush.msra.mxu0 %v657
  %815 = vmatpush.msra.mxu0 %v656
  %816 = vmatmul.f32.gmra.mxu0 %v541
  %v817 = vpop.f32.mrf.mxu0
  %v818 = vadd.f32 %v726, %v817
  %819 = vmatmul.f32.gmra.mxu0 %v545
  %v820 = vpop.f32.mrf.mxu0
  %v821 = vadd.f32 %v729, %v820
  %822 = vmatmul.f32.gmra.mxu0 %v549
  %v823 = vpop.f32.mrf.mxu0
  %v824 = vadd.f32 %v732, %v823
  %825 = vmatmul.f32.gmra.mxu0 %v553
  %v826 = vpop.f32.mrf.mxu0
  %v827 = vadd.f32 %v735, %v826
  %828 = vmatmul.f32.gmra.mxu0 %v557
  %v829 = vpop.f32.mrf.mxu0
  %v830 = vadd.f32 %v738, %v829
  %831 = vmatmul.f32.gmra.mxu0 %v561
  %v832 = vpop.f32.mrf.mxu0
  %v833 = vadd.f32 %v741, %v832
  %834 = vmatmul.f32.gmra.mxu0 %v565
  %v835 = vpop.f32.mrf.mxu0
  %v836 = vadd.f32 %v744, %v835
  %837 = vmatmul.f32.gmra.mxu0 %v569
  %v838 = vpop.f32.mrf.mxu0
  %v839 = vadd.f32 %v747, %v838
  %840 = vmatmul.f32.gmra.mxu0 %v573
  %v841 = vpop.f32.mrf.mxu0
  %v842 = vadd.f32 %v750, %v841
  %843 = vmatmul.f32.gmra.mxu0 %v577
  %v844 = vpop.f32.mrf.mxu0
  %v845 = vadd.f32 %v753, %v844
  %846 = vmatmul.f32.gmra.mxu0 %v581
  %v847 = vpop.f32.mrf.mxu0
  %v848 = vadd.f32 %v756, %v847
  %849 = vmatmul.f32.gmra.mxu0 %v585
  %v850 = vpop.f32.mrf.mxu0
  %v851 = vadd.f32 %v759, %v850
  %852 = vmatmul.f32.gmra.mxu0 %v589
  %v853 = vpop.f32.mrf.mxu0
  %v854 = vadd.f32 %v762, %v853
  %855 = vmatmul.f32.gmra.mxu0 %v593
  %v856 = vpop.f32.mrf.mxu0
  %v857 = vadd.f32 %v765, %v856
  %858 = vmatmul.f32.gmra.mxu0 %v597
  %v859 = vpop.f32.mrf.mxu0
  %v860 = vadd.f32 %v768, %v859
  %861 = vmatmul.f32.gmra.mxu0 %v601
  %v862 = vpop.f32.mrf.mxu0
  %v863 = vadd.f32 %v771, %v862
  %864 = vmatmul.f32.gmra.mxu0 %v605
  %v865 = vpop.f32.mrf.mxu0
  %v866 = vadd.f32 %v774, %v865
  %867 = vmatmul.f32.gmra.mxu0 %v609
  %v868 = vpop.f32.mrf.mxu0
  %v869 = vadd.f32 %v777, %v868
  %870 = vmatmul.f32.gmra.mxu0 %v613
  %v871 = vpop.f32.mrf.mxu0
  %v872 = vadd.f32 %v780, %v871
  %873 = vmatmul.f32.gmra.mxu0 %v617
  %v874 = vpop.f32.mrf.mxu0
  %v875 = vadd.f32 %v783, %v874
  %876 = vmatmul.f32.gmra.mxu0 %v621
  %v877 = vpop.f32.mrf.mxu0
  %v878 = vadd.f32 %v786, %v877
  %879 = vmatmul.f32.gmra.mxu0 %v625
  %v880 = vpop.f32.mrf.mxu0
  %v881 = vadd.f32 %v789, %v880
  %882 = vmatmul.f32.gmra.mxu0 %v629
  %v883 = vpop.f32.mrf.mxu0
  %v884 = vadd.f32 %v792, %v883
  %885 = vmatmul.f32.gmra.mxu0 %v633
  %v886 = vpop.f32.mrf.mxu0
  %v887 = vadd.f32 %v795, %v886
  %888 = vmatmul.f32.gmra.mxu0 %v637
  %v889 = vpop.f32.mrf.mxu0
  %v890 = vadd.f32 %v798, %v889
  %891 = vdwg.mxu0
  %892 = vmatpush.msra.mxu0 %v687
  %893 = vmatpush.msra.mxu0 %v686
  %894 = vmatpush.msra.mxu0 %v685
  %895 = vmatpush.msra.mxu0 %v684
  %896 = vmatpush.msra.mxu0 %v683
  %897 = vmatpush.msra.mxu0 %v682
  %898 = vmatpush.msra.mxu0 %v681
  %899 = vmatpush.msra.mxu0 %v680
  %900 = vmatpush.msra.mxu0 %v679
  %901 = vmatpush.msra.mxu0 %v678
  %902 = vmatpush.msra.mxu0 %v677
  %903 = vmatpush.msra.mxu0 %v676
  %904 = vmatpush.msra.mxu0 %v675
  %905 = vmatpush.msra.mxu0 %v674
  %906 = vmatpush.msra.mxu0 %v673
  %907 = vmatpush.msra.mxu0 %v672
  %908 = vmatmul.f32.gmra.mxu0 %v542
  %v909 = vpop.f32.mrf.mxu0
  %v910 = vadd.f32 %v818, %v909
  %911 = vmatmul.f32.gmra.mxu0 %v546
  %v912 = vpop.f32.mrf.mxu0
  %v913 = vadd.f32 %v821, %v912
  %914 = vmatmul.f32.gmra.mxu0 %v550
  %v915 = vpop.f32.mrf.mxu0
  %v916 = vadd.f32 %v824, %v915
  %917 = vmatmul.f32.gmra.mxu0 %v554
  %v918 = vpop.f32.mrf.mxu0
  %v919 = vadd.f32 %v827, %v918
  %920 = vmatmul.f32.gmra.mxu0 %v558
  %v921 = vpop.f32.mrf.mxu0
  %v922 = vadd.f32 %v830, %v921
  %923 = vmatmul.f32.gmra.mxu0 %v562
  %v924 = vpop.f32.mrf.mxu0
  %v925 = vadd.f32 %v833, %v924
  %926 = vmatmul.f32.gmra.mxu0 %v566
  %v927 = vpop.f32.mrf.mxu0
  %v928 = vadd.f32 %v836, %v927
  %929 = vmatmul.f32.gmra.mxu0 %v570
  %v930 = vpop.f32.mrf.mxu0
  %v931 = vadd.f32 %v839, %v930
  %932 = vmatmul.f32.gmra.mxu0 %v574
  %v933 = vpop.f32.mrf.mxu0
  %v934 = vadd.f32 %v842, %v933
  %935 = vmatmul.f32.gmra.mxu0 %v578
  %v936 = vpop.f32.mrf.mxu0
  %v937 = vadd.f32 %v845, %v936
  %938 = vmatmul.f32.gmra.mxu0 %v582
  %v939 = vpop.f32.mrf.mxu0
  %v940 = vadd.f32 %v848, %v939
  %941 = vmatmul.f32.gmra.mxu0 %v586
  %v942 = vpop.f32.mrf.mxu0
  %v943 = vadd.f32 %v851, %v942
  %944 = vmatmul.f32.gmra.mxu0 %v590
  %v945 = vpop.f32.mrf.mxu0
  %v946 = vadd.f32 %v854, %v945
  %947 = vmatmul.f32.gmra.mxu0 %v594
  %v948 = vpop.f32.mrf.mxu0
  %v949 = vadd.f32 %v857, %v948
  %950 = vmatmul.f32.gmra.mxu0 %v598
  %v951 = vpop.f32.mrf.mxu0
  %v952 = vadd.f32 %v860, %v951
  %953 = vmatmul.f32.gmra.mxu0 %v602
  %v954 = vpop.f32.mrf.mxu0
  %v955 = vadd.f32 %v863, %v954
  %956 = vmatmul.f32.gmra.mxu0 %v606
  %v957 = vpop.f32.mrf.mxu0
  %v958 = vadd.f32 %v866, %v957
  %959 = vmatmul.f32.gmra.mxu0 %v610
  %v960 = vpop.f32.mrf.mxu0
  %v961 = vadd.f32 %v869, %v960
  %962 = vmatmul.f32.gmra.mxu0 %v614
  %v963 = vpop.f32.mrf.mxu0
  %v964 = vadd.f32 %v872, %v963
  %965 = vmatmul.f32.gmra.mxu0 %v618
  %v966 = vpop.f32.mrf.mxu0
  %v967 = vadd.f32 %v875, %v966
  %968 = vmatmul.f32.gmra.mxu0 %v622
  %v969 = vpop.f32.mrf.mxu0
  %v970 = vadd.f32 %v878, %v969
  %971 = vmatmul.f32.gmra.mxu0 %v626
  %v972 = vpop.f32.mrf.mxu0
  %v973 = vadd.f32 %v881, %v972
  %974 = vmatmul.f32.gmra.mxu0 %v630
  %v975 = vpop.f32.mrf.mxu0
  %v976 = vadd.f32 %v884, %v975
  %977 = vmatmul.f32.gmra.mxu0 %v634
  %v978 = vpop.f32.mrf.mxu0
  %v979 = vadd.f32 %v887, %v978
  %980 = vmatmul.f32.gmra.mxu0 %v638
  %v981 = vpop.f32.mrf.mxu0
  %v982 = vadd.f32 %v890, %v981
  %983 = vdwg.mxu0
  %984 = vmatpush.msra.mxu0 %v703
  %985 = vmatpush.msra.mxu0 %v702
  %986 = vmatpush.msra.mxu0 %v701
  %987 = vmatpush.msra.mxu0 %v700
  %988 = vmatpush.msra.mxu0 %v699
  %989 = vmatpush.msra.mxu0 %v698
  %990 = vmatpush.msra.mxu0 %v697
  %991 = vmatpush.msra.mxu0 %v696
  %992 = vmatpush.msra.mxu0 %v695
  %993 = vmatpush.msra.mxu0 %v694
  %994 = vmatpush.msra.mxu0 %v693
  %995 = vmatpush.msra.mxu0 %v692
  %996 = vmatpush.msra.mxu0 %v691
  %997 = vmatpush.msra.mxu0 %v690
  %998 = vmatpush.msra.mxu0 %v689
  %999 = vmatpush.msra.mxu0 %v688
  %1000 = vmatmul.f32.gmra.mxu0 %v543
  %v1001 = vpop.f32.mrf.mxu0
  %v1002 = vadd.f32 %v910, %v1001
  %1003 = vmatmul.f32.gmra.mxu0 %v547
  %v1004 = vpop.f32.mrf.mxu0
  %v1005 = vadd.f32 %v913, %v1004
  %1006 = vmatmul.f32.gmra.mxu0 %v551
  %v1007 = vpop.f32.mrf.mxu0
  %v1008 = vadd.f32 %v916, %v1007
  %1009 = vmatmul.f32.gmra.mxu0 %v555
  %v1010 = vpop.f32.mrf.mxu0
  %v1011 = vadd.f32 %v919, %v1010
  %1012 = vmatmul.f32.gmra.mxu0 %v559
  %v1013 = vpop.f32.mrf.mxu0
  %v1014 = vadd.f32 %v922, %v1013
  %1015 = vmatmul.f32.gmra.mxu0 %v563
  %v1016 = vpop.f32.mrf.mxu0
  %v1017 = vadd.f32 %v925, %v1016
  %1018 = vmatmul.f32.gmra.mxu0 %v567
  %v1019 = vpop.f32.mrf.mxu0
  %v1020 = vadd.f32 %v928, %v1019
  %1021 = vmatmul.f32.gmra.mxu0 %v571
  %v1022 = vpop.f32.mrf.mxu0
  %v1023 = vadd.f32 %v931, %v1022
  %1024 = vmatmul.f32.gmra.mxu0 %v575
  %v1025 = vpop.f32.mrf.mxu0
  %v1026 = vadd.f32 %v934, %v1025
  %1027 = vmatmul.f32.gmra.mxu0 %v579
  %v1028 = vpop.f32.mrf.mxu0
  %v1029 = vadd.f32 %v937, %v1028
  %1030 = vmatmul.f32.gmra.mxu0 %v583
  %v1031 = vpop.f32.mrf.mxu0
  %v1032 = vadd.f32 %v940, %v1031
  %1033 = vmatmul.f32.gmra.mxu0 %v587
  %v1034 = vpop.f32.mrf.mxu0
  %v1035 = vadd.f32 %v943, %v1034
  %1036 = vmatmul.f32.gmra.mxu0 %v591
  %v1037 = vpop.f32.mrf.mxu0
  %v1038 = vadd.f32 %v946, %v1037
  %1039 = vmatmul.f32.gmra.mxu0 %v595
  %v1040 = vpop.f32.mrf.mxu0
  %v1041 = vadd.f32 %v949, %v1040
  %1042 = vmatmul.f32.gmra.mxu0 %v599
  %v1043 = vpop.f32.mrf.mxu0
  %v1044 = vadd.f32 %v952, %v1043
  %1045 = vmatmul.f32.gmra.mxu0 %v603
  %v1046 = vpop.f32.mrf.mxu0
  %v1047 = vadd.f32 %v955, %v1046
  %1048 = vmatmul.f32.gmra.mxu0 %v607
  %v1049 = vpop.f32.mrf.mxu0
  %v1050 = vadd.f32 %v958, %v1049
  %1051 = vmatmul.f32.gmra.mxu0 %v611
  %v1052 = vpop.f32.mrf.mxu0
  %v1053 = vadd.f32 %v961, %v1052
  %1054 = vmatmul.f32.gmra.mxu0 %v615
  %v1055 = vpop.f32.mrf.mxu0
  %v1056 = vadd.f32 %v964, %v1055
  %1057 = vmatmul.f32.gmra.mxu0 %v619
  %v1058 = vpop.f32.mrf.mxu0
  %v1059 = vadd.f32 %v967, %v1058
  %1060 = vmatmul.f32.gmra.mxu0 %v623
  %v1061 = vpop.f32.mrf.mxu0
  %v1062 = vadd.f32 %v970, %v1061
  %1063 = vmatmul.f32.gmra.mxu0 %v627
  %v1064 = vpop.f32.mrf.mxu0
  %v1065 = vadd.f32 %v973, %v1064
  %1066 = vmatmul.f32.gmra.mxu0 %v631
  %v1067 = vpop.f32.mrf.mxu0
  %v1068 = vadd.f32 %v976, %v1067
  %1069 = vmatmul.f32.gmra.mxu0 %v635
  %v1070 = vpop.f32.mrf.mxu0
  %v1071 = vadd.f32 %v979, %v1070
  %1072 = vmatmul.f32.gmra.mxu0 %v639
  %v1073 = vpop.f32.mrf.mxu0
  %v1074 = vadd.f32 %v982, %v1073
  %1075 = vdwg.mxu0
  %1076 = vst.msk [vmem:[%s5] sm:$0xff] %vm83, %v1002
  %1077 = vst.msk [vmem:[%s5 + $0x8] sm:$0xff] %vm83, %v1005
  %1078 = vst.msk [vmem:[%s5 + $0x10] sm:$0xff] %vm83, %v1008
  %1079 = vst.msk [vmem:[%s5 + $0x18] sm:$0xff] %vm83, %v1011
  %1080 = vst.msk [vmem:[%s5 + $0x20] sm:$0xff] %vm83, %v1014
  %1081 = vst.msk [vmem:[%s5 + $0x28] sm:$0xff] %vm83, %v1017
  %1082 = vst.msk [vmem:[%s5 + $0x30] sm:$0xff] %vm83, %v1020
  %1083 = vst.msk [vmem:[%s5 + $0x38] sm:$0xff] %vm83, %v1023
  %1084 = vst.msk [vmem:[%s5 + $0x40] sm:$0xff] %vm83, %v1026
  %1085 = vst.msk [vmem:[%s5 + $0x48] sm:$0xff] %vm83, %v1029
  %1086 = vst.msk [vmem:[%s5 + $0x50] sm:$0xff] %vm83, %v1032
  %1087 = vst.msk [vmem:[%s5 + $0x58] sm:$0xff] %vm83, %v1035
  %1088 = vst.msk [vmem:[%s5 + $0x60] sm:$0xff] %vm83, %v1038
  %1089 = vst.msk [vmem:[%s5 + $0x68] sm:$0xff] %vm83, %v1041
  %1090 = vst.msk [vmem:[%s5 + $0x70] sm:$0xff] %vm83, %v1044
  %1091 = vst.msk [vmem:[%s5 + $0x78] sm:$0xff] %vm83, %v1047
  %1092 = vst.msk [vmem:[%s5 + $0x80] sm:$0xff] %vm83, %v1050
  %1093 = vst.msk [vmem:[%s5 + $0x88] sm:$0xff] %vm83, %v1053
  %1094 = vst.msk [vmem:[%s5 + $0x90] sm:$0xff] %vm83, %v1056
  %1095 = vst.msk [vmem:[%s5 + $0x98] sm:$0xff] %vm83, %v1059
  %1096 = vst.msk [vmem:[%s5 + $0xa0] sm:$0xff] %vm83, %v1062
  %1097 = vst.msk [vmem:[%s5 + $0xa8] sm:$0xff] %vm83, %v1065
  %1098 = vst.msk [vmem:[%s5 + $0xb0] sm:$0xff] %vm83, %v1068
  %1099 = vst.msk [vmem:[%s5 + $0xb8] sm:$0xff] %vm83, %v1071
  %1100 = vst.msk [vmem:[%s5 + $0xc0] sm:$0xff] %vm83, %v1074
  // Predicated region
  $region22: #{tpu_custom_call.1} parent=0 // pred_check
    _
  $region23: #{tpu_custom_call.1} parent=0 // pred_check_branch
    %1102 = sbr.rel (0) target = $region25
  $region24: #{tpu_custom_call.1} parent=0 // pred_region
    _
  $region25: #{tpu_custom_call.1} parent=0 // pred_fallthru
    _
  // Predicated region
  $region26: #{tpu_custom_call.1} parent=0 // pred_check
    _
  $region27: #{tpu_custom_call.1} parent=0 // pred_check_branch
    %1104 = sbr.rel (0) target = $region29
  $region28: #{tpu_custom_call.1} parent=0 // pred_region
    _
  $region29: #{tpu_custom_call.1} parent=0 // pred_fallthru
    _

</llo_original>
